<compile_context>
chip_gen: v7x
topology: tpu7x:2x2x1
jax: 0.10.0
libtpu: 0.0.40
codegen_flags: <defaults>
</compile_context>

<pallas_src>
import functools

import jax
import jax.numpy as jnp
from jax.experimental import pallas as pl
from jax.experimental.pallas import tpu as pltpu


def _round_up(x, m):
    return ((x + m - 1) // m) * m


def _kldiv_kernel(logits_ref, targets_ref, out_ref, *, T, n_rows, tb, mask_rows):
    inv_t = jnp.float32(1.0 / T)
    lz = logits_ref[...].astype(jnp.float32) * inv_t      # (tb, C)
    tz = targets_ref[...].astype(jnp.float32) * inv_t     # (tb, C)
    C = lz.shape[-1]

    # q = log_softmax(logits / T) along the class axis.
    lmax = jnp.max(lz, axis=-1, keepdims=True)
    e_l = jnp.exp(lz - lmax)
    q = (lz - lmax) - jnp.log(jnp.sum(e_l, axis=-1, keepdims=True))

    # p = softmax(targets / T), log_p = log_softmax(targets / T).
    # Reuse e_t for p: 2 full-width exps total (not 3).
    tmax = jnp.max(tz, axis=-1, keepdims=True)
    e_t = jnp.exp(tz - tmax)
    s_t = jnp.sum(e_t, axis=-1, keepdims=True)
    log_p = (tz - tmax) - jnp.log(s_t)
    p = e_t * pl.reciprocal(s_t, approx=False)

    term = p * (log_p - q)                                 # (tb, C)

    def reduce8(t):
        # (tb, C) -> (8, C): sublane-aligned 8-row groups summed with plain VPU
        # adds over full vregs (no cross-lane / XLU reduction in the hot loop).
        return t.reshape(tb // 8, 8, C).sum(axis=0)

    if mask_rows:
        i = pl.program_id(0)
        last = pl.num_programs(0) - 1

        @pl.when(i == last)
        def _():
            # Discard padded rows of the partial last block with a select (NOT a
            # multiply): the out-of-range rows hold unspecified data and may carry
            # NaN/Inf through arithmetic.
            row_start = i * tb
            rows = jax.lax.broadcasted_iota(jnp.int32, (tb, 1), 0) + row_start
            masked = jnp.where(rows < n_rows, term, jnp.float32(0.0))
            out_ref[...] = reduce8(masked)

        @pl.when(i != last)
        def _():
            out_ref[...] = reduce8(term)
    else:
        out_ref[...] = reduce8(term)


def kldiv_pallas(logits, targets, T=1.0, reduction='batchmean', *, tb=None):
    """Temperature-scaled KL divergence, reduction='batchmean'. Inputs: (N, C)."""
    assert reduction == 'batchmean', "only 'batchmean' is implemented"
    assert logits.shape == targets.shape and logits.ndim == 2
    N, C = logits.shape
    itemsize = max(jnp.dtype(logits.dtype).itemsize,
                   jnp.dtype(targets.dtype).itemsize)

    # Generation-aware scoped-VMEM budget: ~0.75 of physical capacity
    # (v5e/v6e: 128 MiB -> ~96 MiB, v7x: 64 MiB -> ~48 MiB).
    try:
        vmem_cap = int(pltpu.get_tpu_info().vmem_capacity_bytes)
    except Exception:
        vmem_cap = 64 * 1024 * 1024  # conservative fallback
    vmem_limit = min(int(0.75 * vmem_cap), 100 * 1024 * 1024)

    if tb is None:
        # Per-row working set: 2 inputs x 2 pipeline buffers (DMA) + ~9 live
        # f32 (tb, C) temps (lz, tz, e_l, e_t, q, log_p, p, term, partial).
        bytes_per_row = 4 * C * itemsize + 36 * C
        tb = vmem_limit // max(bytes_per_row, 1)
        tb = max(8, min(4096, tb, _round_up(N, 8)))
        tb -= tb % 8
    assert tb >= 8 and tb % 8 == 0

    total_blocks = pl.cdiv(N, tb)
    mask_rows = (N % tb) != 0

    kernel = functools.partial(
        _kldiv_kernel, T=float(T), n_rows=N, tb=tb, mask_rows=mask_rows)

    out_bytes = total_blocks * 8 * C * 4
    cost = pl.CostEstimate(
        flops=int(7 * N * C),
        transcendentals=int(2 * N * C),
        bytes_accessed=int(2 * N * C * itemsize + out_bytes),
    )

    partials = pl.pallas_call(
        kernel,
        out_shape=jax.ShapeDtypeStruct((total_blocks * 8, C), jnp.float32),
        grid_spec=pltpu.PrefetchScalarGridSpec(
            num_scalar_prefetch=0,
            grid=(total_blocks,),
            in_specs=[
                pl.BlockSpec((tb, C), lambda i: (i, 0)),
                pl.BlockSpec((tb, C), lambda i: (i, 0)),
            ],
            # Each block owns its own (8, C) lane-dense slab -> unmasked full-tile
            # stores and parity-independent megacore sharding on v7x.
            out_specs=pl.BlockSpec((8, C), lambda i: (i, 0)),
        ),
        compiler_params=pltpu.CompilerParams(
            dimension_semantics=("parallel",),
            vmem_limit_bytes=vmem_limit,
        ),
        cost_estimate=cost,
    )(logits, targets)

    # Tiny final reduce + batchmean * T^2 scaling, done once outside the kernel.
    return jnp.sum(partials) * jnp.float32(T * T / N)


def kldiv_ref(logits, targets, T=1.0):
    q = jax.nn.log_softmax(logits / T, axis=1)
    log_p = jax.nn.log_softmax(targets / T, axis=1)
    p = jnp.exp(log_p)
    kl = jnp.sum(p * (log_p - q)) / logits.shape[0]
    return kl * (T * T)


if __name__ == "__main__":
    key = jax.random.PRNGKey(0)
    k1, k2, k3, k4 = jax.random.split(key, 4)

    # Tile-friendly case.
    N, C, T = 16, 128, 4.0
    logits = jax.random.normal(k1, (N, C), dtype=jnp.float32)
    targets = jax.random.normal(k2, (N, C), dtype=jnp.float32)
    out = jax.block_until_ready(kldiv_pallas(logits, targets, T=T))
    ref = kldiv_ref(logits, targets, T=T)
    assert jnp.allclose(out, ref, rtol=1e-5, atol=1e-6), (out, ref)

    # Ragged case (exercises the masked last block).
    N2, T2 = 13, 2.0
    logits2 = jax.random.normal(k3, (N2, C), dtype=jnp.float32)
    targets2 = jax.random.normal(k4, (N2, C), dtype=jnp.float32)
    out2 = jax.block_until_ready(kldiv_pallas(logits2, targets2, T=T2))
    ref2 = kldiv_ref(logits2, targets2, T=T2)
    assert jnp.allclose(out2, ref2, rtol=1e-5, atol=1e-6), (out2, ref2)

    print("KERNEL_OK")
</pallas_src>

<mosaic_0001>
module attributes {stable_mosaic.version = 11 : i64} {
  func.func @_kldiv_kernel(%arg0: i32, %arg1: memref<16x128xf32, #tpu.memory_space<vmem>>, %arg2: memref<16x128xf32, #tpu.memory_space<vmem>>, %arg3: memref<8x128xf32, #tpu.memory_space<vmem>>) attributes {dimension_semantics = [#tpu.dimension_semantics<parallel>], iteration_bounds = array<i64: 1>, scalar_prefetch = 0 : i64, scratch_operands = 0 : i64, tpu.core_type = #tpu.core_type<tc>, window_params = [{transform_indices = @transform_0, window_bounds = array<i64: 16, 128>}, {transform_indices = @transform_1, window_bounds = array<i64: 16, 128>}, {transform_indices = @transform_2, window_bounds = array<i64: 8, 128>}]} {
    %c0 = arith.constant 0 : index
    %c0_0 = arith.constant 0 : index
    %0 = vector.load %arg1[%c0, %c0_0] : memref<16x128xf32, #tpu.memory_space<vmem>>, vector<16x128xf32>
    %cst = arith.constant 2.500000e-01 : f32
    %1 = vector.broadcast %cst : f32 to vector<16x128xf32>
    %2 = arith.mulf %0, %1 : vector<16x128xf32>
    %c0_1 = arith.constant 0 : index
    %c0_2 = arith.constant 0 : index
    %3 = vector.load %arg2[%c0_1, %c0_2] : memref<16x128xf32, #tpu.memory_space<vmem>>, vector<16x128xf32>
    %cst_3 = arith.constant 2.500000e-01 : f32
    %4 = vector.broadcast %cst_3 : f32 to vector<16x128xf32>
    %5 = arith.mulf %3, %4 : vector<16x128xf32>
    %cst_4 = arith.constant dense<0xFF800000> : vector<16xf32>
    %6 = vector.multi_reduction <maximumf>, %2, %cst_4 [1] : vector<16x128xf32> to vector<16xf32>
    %7 = vector.shape_cast %6 : vector<16xf32> to vector<16x1xf32>
    %8 = vector.broadcast %7 : vector<16x1xf32> to vector<16x128xf32>
    %9 = arith.subf %2, %8 : vector<16x128xf32>
    %10 = math.exp %9 : vector<16x128xf32>
    %11 = vector.broadcast %7 : vector<16x1xf32> to vector<16x128xf32>
    %12 = arith.subf %2, %11 : vector<16x128xf32>
    %cst_5 = arith.constant dense<0.000000e+00> : vector<16xf32>
    %13 = vector.multi_reduction <add>, %10, %cst_5 [1] : vector<16x128xf32> to vector<16xf32>
    %14 = vector.shape_cast %13 : vector<16xf32> to vector<16x1xf32>
    %15 = math.log %14 : vector<16x1xf32>
    %16 = vector.broadcast %15 : vector<16x1xf32> to vector<16x128xf32>
    %17 = arith.subf %12, %16 : vector<16x128xf32>
    %cst_6 = arith.constant dense<0xFF800000> : vector<16xf32>
    %18 = vector.multi_reduction <maximumf>, %5, %cst_6 [1] : vector<16x128xf32> to vector<16xf32>
    %19 = vector.shape_cast %18 : vector<16xf32> to vector<16x1xf32>
    %20 = vector.broadcast %19 : vector<16x1xf32> to vector<16x128xf32>
    %21 = arith.subf %5, %20 : vector<16x128xf32>
    %22 = math.exp %21 : vector<16x128xf32>
    %cst_7 = arith.constant dense<0.000000e+00> : vector<16xf32>
    %23 = vector.multi_reduction <add>, %22, %cst_7 [1] : vector<16x128xf32> to vector<16xf32>
    %24 = vector.shape_cast %23 : vector<16xf32> to vector<16x1xf32>
    %25 = vector.broadcast %19 : vector<16x1xf32> to vector<16x128xf32>
    %26 = arith.subf %5, %25 : vector<16x128xf32>
    %27 = math.log %24 : vector<16x1xf32>
    %28 = vector.broadcast %27 : vector<16x1xf32> to vector<16x128xf32>
    %29 = arith.subf %26, %28 : vector<16x128xf32>
    %30 = tpu.reciprocal %24 : vector<16x1xf32> -> vector<16x1xf32>
    %31 = vector.broadcast %30 : vector<16x1xf32> to vector<16x128xf32>
    %32 = arith.mulf %22, %31 : vector<16x128xf32>
    %33 = arith.subf %29, %17 : vector<16x128xf32>
    %34 = arith.mulf %32, %33 : vector<16x128xf32>
    %35 = vector.shape_cast %34 : vector<16x128xf32> to vector<2x8x128xf32>
    %cst_8 = arith.constant dense<0.000000e+00> : vector<8x128xf32>
    %36 = vector.multi_reduction <add>, %35, %cst_8 [0] : vector<2x8x128xf32> to vector<8x128xf32>
    %c0_9 = arith.constant 0 : index
    %c0_10 = arith.constant 0 : index
    %37 = vector.load %arg3[%c0_9, %c0_10] : memref<8x128xf32, #tpu.memory_space<vmem>>, vector<8x128xf32>
    tpu.vector_store %arg3[%c0_9, %c0_10], %36 {strides = array<i32>} : memref<8x128xf32, #tpu.memory_space<vmem>>, vector<8x128xf32>,
    return
  }
  func.func @transform_0(%arg0: i32) -> (i32, i32) {
    %c0_i32 = arith.constant 0 : i32
    %c0_i32_0 = arith.constant 0 : i32
    return %arg0, %c0_i32 : i32, i32
  }
  func.func @transform_1(%arg0: i32) -> (i32, i32) {
    %c0_i32 = arith.constant 0 : i32
    %c0_i32_0 = arith.constant 0 : i32
    return %arg0, %c0_i32 : i32, i32
  }
  func.func @transform_2(%arg0: i32) -> (i32, i32) {
    %c0_i32 = arith.constant 0 : i32
    %c0_i32_0 = arith.constant 0 : i32
    return %arg0, %c0_i32 : i32, i32
  }
}

</mosaic_0001>

<llo_original>
// kernel: tpu_custom_call.1
$region0: #{tpu_custom_call.1}
  #allocation0 [shape = 'u32[]', space=smem, size = 0x4, offset = 0x4, fixed_abs, tag = 'smem constant byte address 0x4 - core index']
  #allocation1 [shape = 'u32[144,128]{1,0:T(1,128)}', space=vmem, size = 0x12000, scoped, tag = 'internal scratch']
  %s0 = inlined_call_operand.hbm [shape: f32[16,128], index: 0, kind: input, shape index: {}]
  %s1 = inlined_call_operand.hbm [shape: f32[16,128], index: 1, kind: input, shape index: {}]
  %s2 = inlined_call_operand.hbm [shape: f32[8,128], index: 2, kind: output, shape index: {}]
  %s3 = sld [smem:[#allocation0]]
  $region26: #{tpu_custom_call.1} parent=0
    _
  %s5 = ssub.s32 1, %s3
  %s6 = scalar_select 0, %s5, %s3
  $region1: #{tpu_custom_call.1} parent=0
    #allocation2 [shape = 'u8[8192]{0}', space=vmem, size = 0x2000, scoped, tag = 'input window, operand 0, single buffered']
    #allocation3 [shape = 's32[1]{0}', space=sflag, size = 0x4, scoped, tag = 'scoped memory for tpu_custom_call.1']
    #allocation4 [shape = 's32[1]{0}', space=sflag, size = 0x4, scoped, tag = 'scoped memory for tpu_custom_call.1']
    #allocation5 [shape = 'u8[8192]{0}', space=vmem, size = 0x2000, scoped, tag = 'input window, operand 1, single buffered']
    #allocation6 [shape = 's32[1]{0}', space=sflag, size = 0x4, scoped, tag = 'scoped memory for tpu_custom_call.1']
    #allocation7 [shape = 'u8[4096]{0}', space=vmem, size = 0x1000, scoped, tag = 'output window, operand 0, single buffered']
    %7 = vsyncpa [#allocation3], 0
    %8 = vsyncpa [#allocation6], 0
    %9 = vsyncpa [#allocation4], 0
    // Predicated region
    $region2: #{tpu_custom_call.1} parent=1 // pred_check
      _
    $region3: #{tpu_custom_call.1} parent=1 // pred_check_branch
      %11 = sbr.rel (0) target = $region5
    $region4: #{tpu_custom_call.1} parent=1 // pred_region
      %s13 = ssub.s32 256, 256
      %14 = vsyncadd [#allocation3], %s13
      %s15 = sshll.u32 [#allocation2], 4
      %s16 = int_to_ptr.vmem [resolvable:$true] %s15
      %21 = dma.hbm_to_vmem [thread:$0]  %s0, 256, %s16, [#allocation3], 128, 128, 8
    $region5: #{tpu_custom_call.1} parent=1 // pred_fallthru
      _
    // Predicated region
    $region6: #{tpu_custom_call.1} parent=1 // pred_check
      _
    $region7: #{tpu_custom_call.1} parent=1 // pred_check_branch
      %23 = sbr.rel (0) target = $region9
    $region8: #{tpu_custom_call.1} parent=1 // pred_region
      %s25 = ssub.s32 256, 256
      %26 = vsyncadd [#allocation6], %s25
      %s27 = sshll.u32 [#allocation5], 4
      %s28 = int_to_ptr.vmem [resolvable:$true] %s27
      %33 = dma.hbm_to_vmem [thread:$0]  %s1, 256, %s28, [#allocation6], 128, 128, 8
    $region9: #{tpu_custom_call.1} parent=1 // pred_fallthru
      _
    // Predicated region
    $region10: #{tpu_custom_call.1} parent=1 // pred_check
      _
    $region11: #{tpu_custom_call.1} parent=1 // pred_check_branch
      %35 = sbr.rel (0) target = $region13
    $region12: #{tpu_custom_call.1} parent=1 // pred_region
      %36 = dma.done [#allocation3], 256
    $region13: #{tpu_custom_call.1} parent=1 // pred_fallthru
      _
    // Predicated region
    $region14: #{tpu_custom_call.1} parent=1 // pred_check
      _
    $region15: #{tpu_custom_call.1} parent=1 // pred_check_branch
      %38 = sbr.rel (0) target = $region17
    $region16: #{tpu_custom_call.1} parent=1 // pred_region
      %39 = dma.done [#allocation6], 256
    $region17: #{tpu_custom_call.1} parent=1 // pred_fallthru
      _
    %v40 = vld [vmem:[#allocation2] sm:$0xff]
    %v41 = vld [vmem:[#allocation2 + $0x8] sm:$0xff]
    %v42 = vmul.f32 %v40, 0.25
    %v43 = vmul.f32 %v41, 0.25
    %v44 = vld [vmem:[#allocation5] sm:$0xff]
    %v45 = vld [vmem:[#allocation5 + $0x8] sm:$0xff]
    %v46 = vmul.f32 %v44, 0.25
    %v47 = vmul.f32 %v45, 0.25
    %48 = vmax.xlane.f32.xlu0 %v42
    %v49 = vpop.xlane.xlu0 %48
    %50 = vmax.xlane.f32.xlu0 %v43
    %v51 = vpop.xlane.xlu0 %50
    %v52 = vsub.f32 %v42, %v49
    %v53 = vsub.f32 %v43, %v51
    %v54 = vmul.f32 %v52, 1.442695
    %v55 = vpow.pop %v54
    %v56 = vmul.f32 %v53, 1.442695
    %v57 = vpow.pop %v56
    %58 = vadd.xlane.f32.xlu0 %v55
    %v59 = vpop.xlane.xlu0 %58
    %60 = vadd.xlane.f32.xlu0 %v57
    %v61 = vpop.xlane.xlu0 %60
    %v62 = vlog2.pop %v59
    %v63 = vmul.f32 %v62, 0.6931472
    %v64 = vlog2.pop %v61
    %v65 = vmul.f32 %v64, 0.6931472
    %v66 = vsub.f32 %v52, %v63
    %v67 = vsub.f32 %v53, %v65
    %68 = vmax.xlane.f32.xlu0 %v46
    %v69 = vpop.xlane.xlu0 %68
    %70 = vmax.xlane.f32.xlu0 %v47
    %v71 = vpop.xlane.xlu0 %70
    %v72 = vsub.f32 %v46, %v69
    %v73 = vsub.f32 %v47, %v71
    %v74 = vmul.f32 %v72, 1.442695
    %v75 = vpow.pop %v74
    %v76 = vmul.f32 %v73, 1.442695
    %v77 = vpow.pop %v76
    %78 = vadd.xlane.f32.xlu0 %v75
    %v79 = vpop.xlane.xlu0 %78
    %80 = vadd.xlane.f32.xlu0 %v77
    %v81 = vpop.xlane.xlu0 %80
    %v82 = vlog2.pop %v79
    %v83 = vmul.f32 %v82, 0.6931472
    %v84 = vlog2.pop %v81
    %v85 = vmul.f32 %v84, 0.6931472
    %v86 = vsub.f32 %v72, %v83
    %v87 = vsub.f32 %v73, %v85
    %v88 = vrcp.pop %v79
    %v89 = vrcp.pop %v81
    %v90 = vmul.f32 %v75, %v88
    %v91 = vmul.f32 %v77, %v89
    %v92 = vsub.f32 %v86, %v66
    %v93 = vsub.f32 %v87, %v67
    %v94 = vmul.f32 %v90, %v92
    %v95 = vmul.f32 %v91, %v93
    %v96 = vadd.f32 %v94, %v95
    %97 = vst [vmem:[#allocation7] sm:$0xff] %v96
    // Predicated region
    $region18: #{tpu_custom_call.1} parent=1 // pred_check
      _
    $region19: #{tpu_custom_call.1} parent=1 // pred_check_branch
      %99 = sbr.rel (0) target = $region21
    $region20: #{tpu_custom_call.1} parent=1 // pred_region
      %s101 = ssub.s32 128, 128
      %102 = vsyncadd [#allocation4], %s101
      %s104 = sshll.u32 [#allocation7], 4
      %s105 = int_to_ptr.vmem [resolvable:$true] %s104
      %107 = dma.vmem_to_hbm [thread:$0]  %s105, 128, %s2, [#allocation4]
    $region21: #{tpu_custom_call.1} parent=1 // pred_fallthru
      _
    // Predicated region
    $region22: #{tpu_custom_call.1} parent=1 // pred_check
      _
    $region23: #{tpu_custom_call.1} parent=1 // pred_check_branch
      %109 = sbr.rel (0) target = $region25
    $region24: #{tpu_custom_call.1} parent=1 // pred_region
      %110 = dma.done [#allocation4], 128
    $region25: #{tpu_custom_call.1} parent=1 // pred_fallthru
      _
    %111 = vsyncpa [#allocation3], 1
    %112 = vsyncpa [#allocation6], 1
    %113 = vsyncpa [#allocation4], 1

</llo_original>
